<compile_context>
chip_gen: v7x
topology: tpu7x:2x2x1
jax: 0.10.0
libtpu: 0.0.40
codegen_flags: <defaults>
</compile_context>

<pallas_src>
import functools

import jax
import jax.numpy as jnp
from jax.experimental import pallas as pl
from jax.experimental.pallas import tpu as pltpu


def _focal_loss_kernel(x_ref, t_ref, o_ref, *, gamma, n_rows, tile_n):
    i = pl.program_id(0)

    logits = x_ref[...].astype(jnp.float32)              # (tile_n, C)
    tgt = t_ref[...]                                      # (tile_n, 1) int32

    # numerically stable softmax pieces
    m = jnp.max(logits, axis=-1, keepdims=True)           # (tile_n, 1)
    shifted = logits - m                                   # (tile_n, C)
    exps = jnp.exp(shifted)                                # (tile_n, C)
    sumexp = jnp.sum(exps, axis=-1, keepdims=True)         # (tile_n, 1)

    # one-hot gather of the target class (no in-kernel gather op)
    col = jax.lax.broadcasted_iota(jnp.int32, logits.shape, 1)
    onehot = col == tgt                                    # (tile_n, C)
    shifted_tgt = jnp.sum(jnp.where(onehot, shifted, 0.0), axis=-1, keepdims=True)
    exp_tgt = jnp.sum(jnp.where(onehot, exps, 0.0), axis=-1, keepdims=True)

    ce = jnp.log(sumexp) - shifted_tgt                     # = -log p_t, (tile_n, 1)
    pt = exp_tgt / sumexp                                  # reuse exps; no extra exp(-ce)

    # (1 - pt) ** gamma : multiply chain for small integer gamma (VPU, not EUP)
    u = 1.0 - pt
    g = float(gamma)
    if g == int(g) and 0 <= int(g) <= 8:
        w = jnp.ones_like(u)
        for _ in range(int(g)):
            w = w * u
    else:
        w = u ** jnp.float32(g)

    focal = w * ce                                         # alpha & 1/N applied in wrapper

    # mask rows belonging to the padded tail of the last tile
    row = jax.lax.broadcasted_iota(jnp.int32, focal.shape, 0) + i * tile_n
    focal = jnp.where(row < n_rows, focal, 0.0)

    o_ref[0, 0] = jnp.sum(focal)                           # per-tile partial sum


def multi_focal_loss(inputs, targets, alpha=0.25, gamma=2, reduction="mean"):
    """Pallas TPU implementation of MultiFocalLoss.forward.

    inputs : (N, C) logits (any float dtype; cast to f32 inside the kernel)
    targets: (N,) integer class ids
    """
    n, c = inputs.shape
    targets_col = targets.astype(jnp.int32).reshape(n, 1)

    # <=512 rows: single full-extent block; otherwise 512-row tiles (mult. of 8)
    tile_n = n if n <= 512 else 512
    num_tiles = pl.cdiv(n, tile_n)

    kernel = functools.partial(
        _focal_loss_kernel, gamma=gamma, n_rows=n, tile_n=tile_n
    )

    partials = pl.pallas_call(
        kernel,
        out_shape=jax.ShapeDtypeStruct((num_tiles, 1), jnp.float32),
        grid=(num_tiles,),
        in_specs=[
            pl.BlockSpec((tile_n, c), lambda i: (i, 0)),   # logits tile (VMEM)
            pl.BlockSpec((tile_n, 1), lambda i: (i, 0)),   # targets tile (VMEM)
        ],
        out_specs=pl.BlockSpec(
            (1, 1), lambda i: (i, 0), memory_space=pltpu.MemorySpace.SMEM
        ),
        compiler_params=pltpu.CompilerParams(
            dimension_semantics=("parallel",),
        ),
    )(inputs, targets_col)

    total = jnp.sum(partials)                               # tiny (num_tiles,) sum
    if reduction == "mean":
        return total * jnp.float32(float(alpha) / n)
    elif reduction == "sum":
        return total * jnp.float32(float(alpha))
    else:
        # TODO(synk): reduction='none' (per-sample focal vector) not implemented.
        raise NotImplementedError("only 'mean' and 'sum' reductions are implemented")


def _reference(inputs, targets, alpha=0.25, gamma=2, reduction="mean"):
    # pure-JAX reference mirroring the PyTorch module
    logp = jax.nn.log_softmax(inputs.astype(jnp.float32), axis=-1)
    ce = -jnp.take_along_axis(logp, targets[:, None].astype(jnp.int32), axis=-1)[:, 0]
    pt = jnp.exp(-ce)
    focal = alpha * (1.0 - pt) ** gamma * ce
    if reduction == "mean":
        return jnp.mean(focal)
    return jnp.sum(focal)


if __name__ == "__main__":
    key = jax.random.PRNGKey(0)
    k1, k2, k3, k4 = jax.random.split(key, 4)

    # small test consistent with the module's (batch, num_classes) convention
    N, C = 8, 32
    logits = jax.random.normal(k1, (N, C), dtype=jnp.float32)
    targets = jax.random.randint(k2, (N,), 0, C, dtype=jnp.int32)

    loss = multi_focal_loss(logits, targets, alpha=0.25, gamma=2, reduction="mean")
    loss = jax.block_until_ready(loss)
    ref = _reference(logits, targets, alpha=0.25, gamma=2)
    assert jnp.allclose(loss, ref, rtol=1e-5, atol=1e-6), (loss, ref)

    # second check exercising the multi-tile grid + masked partial last tile
    N2, C2 = 1000, 32
    logits2 = jax.random.normal(k3, (N2, C2), dtype=jnp.float32)
    targets2 = jax.random.randint(k4, (N2,), 0, C2, dtype=jnp.int32)

    loss2 = multi_focal_loss(logits2, targets2, alpha=0.25, gamma=2, reduction="mean")
    loss2 = jax.block_until_ready(loss2)
    ref2 = _reference(logits2, targets2, alpha=0.25, gamma=2)
    assert jnp.allclose(loss2, ref2, rtol=1e-5, atol=1e-6), (loss2, ref2)

    print("KERNEL_OK")
</pallas_src>

<mosaic_0001>
module attributes {stable_mosaic.version = 11 : i64} {
  func.func @_focal_loss_kernel(%arg0: i32, %arg1: memref<8x32xf32, #tpu.memory_space<vmem>>, %arg2: memref<8x1xi32, #tpu.memory_space<vmem>>, %arg3: memref<1x1xf32, #tpu.memory_space<smem>>) attributes {dimension_semantics = [#tpu.dimension_semantics<parallel>], iteration_bounds = array<i64: 1>, scalar_prefetch = 0 : i64, scratch_operands = 0 : i64, tpu.core_type = #tpu.core_type<tc>, window_params = [{transform_indices = @transform_0, window_bounds = array<i64: 8, 32>}, {transform_indices = @transform_1, window_bounds = array<i64: 8, 1>}, {transform_indices = @transform_2, window_bounds = array<i64: 1, 1>}]} {
    %c0 = arith.constant 0 : index
    %c0_0 = arith.constant 0 : index
    %0 = vector.load %arg1[%c0, %c0_0] : memref<8x32xf32, #tpu.memory_space<vmem>>, vector<8x32xf32>
    %c0_1 = arith.constant 0 : index
    %c0_2 = arith.constant 0 : index
    %1 = vector.load %arg2[%c0_1, %c0_2] : memref<8x1xi32, #tpu.memory_space<vmem>>, vector<8x1xi32>
    %cst = arith.constant dense<0xFF800000> : vector<8xf32>
    %2 = vector.multi_reduction <maximumf>, %0, %cst [1] : vector<8x32xf32> to vector<8xf32>
    %3 = vector.shape_cast %2 : vector<8xf32> to vector<8x1xf32>
    %4 = vector.broadcast %3 : vector<8x1xf32> to vector<8x32xf32>
    %5 = arith.subf %0, %4 : vector<8x32xf32>
    %6 = math.exp %5 : vector<8x32xf32>
    %cst_3 = arith.constant dense<0.000000e+00> : vector<8xf32>
    %7 = vector.multi_reduction <add>, %6, %cst_3 [1] : vector<8x32xf32> to vector<8xf32>
    %8 = vector.shape_cast %7 : vector<8xf32> to vector<8x1xf32>
    %9 = tpu.iota {dimensions = array<i32: 1>} : vector<8x32xi32>
    %10 = vector.broadcast %1 : vector<8x1xi32> to vector<8x32xi32>
    %11 = arith.cmpi eq, %9, %10 : vector<8x32xi32>
    %cst_4 = arith.constant 0.000000e+00 : f32
    %12 = vector.broadcast %cst_4 : f32 to vector<8x32xf32>
    %13 = arith.select %11, %5, %12 : vector<8x32xi1>, vector<8x32xf32>
    %cst_5 = arith.constant dense<0.000000e+00> : vector<8xf32>
    %14 = vector.multi_reduction <add>, %13, %cst_5 [1] : vector<8x32xf32> to vector<8xf32>
    %15 = vector.shape_cast %14 : vector<8xf32> to vector<8x1xf32>
    %cst_6 = arith.constant 0.000000e+00 : f32
    %16 = vector.broadcast %cst_6 : f32 to vector<8x32xf32>
    %17 = arith.select %11, %6, %16 : vector<8x32xi1>, vector<8x32xf32>
    %cst_7 = arith.constant dense<0.000000e+00> : vector<8xf32>
    %18 = vector.multi_reduction <add>, %17, %cst_7 [1] : vector<8x32xf32> to vector<8xf32>
    %19 = vector.shape_cast %18 : vector<8xf32> to vector<8x1xf32>
    %20 = math.log %8 : vector<8x1xf32>
    %21 = arith.subf %20, %15 : vector<8x1xf32>
    %22 = arith.divf %19, %8 : vector<8x1xf32>
    %cst_8 = arith.constant 1.000000e+00 : f32
    %23 = vector.broadcast %cst_8 : f32 to vector<8x1xf32>
    %24 = arith.subf %23, %22 : vector<8x1xf32>
    %cst_9 = arith.constant 1.000000e+00 : f32
    %25 = vector.broadcast %cst_9 : f32 to vector<8x1xf32>
    %26 = arith.mulf %25, %24 : vector<8x1xf32>
    %27 = arith.mulf %26, %24 : vector<8x1xf32>
    %28 = arith.mulf %27, %21 : vector<8x1xf32>
    %29 = tpu.iota {dimensions = array<i32: 0>} : vector<8x1xi32>
    %c8_i32 = arith.constant 8 : i32
    %30 = arith.muli %arg0, %c8_i32 : i32
    %31 = vector.broadcast %30 : i32 to vector<8x1xi32>
    %32 = arith.addi %29, %31 : vector<8x1xi32>
    %c8_i32_10 = arith.constant 8 : i32
    %33 = vector.broadcast %c8_i32_10 : i32 to vector<8x1xi32>
    %34 = arith.cmpi slt, %32, %33 : vector<8x1xi32>
    %cst_11 = arith.constant 0.000000e+00 : f32
    %35 = vector.broadcast %cst_11 : f32 to vector<8x1xf32>
    %36 = arith.select %34, %28, %35 : vector<8x1xi1>, vector<8x1xf32>
    %37 = vector.shape_cast %36 : vector<8x1xf32> to vector<1x8x1xf32>
    %cst_12 = arith.constant dense<0.000000e+00> : vector<1xf32>
    %38 = vector.multi_reduction <add>, %37, %cst_12 [1, 2] : vector<1x8x1xf32> to vector<1xf32>
    %39 = vector.shape_cast %38 : vector<1xf32> to vector<1x1x1xf32>
    %40 = vector.extract %39[0, 0, 0] : f32 from vector<1x1x1xf32>
    %c0_13 = arith.constant 0 : index
    %c0_14 = arith.constant 0 : index
    %41 = memref.load %arg3[%c0_13, %c0_14] : memref<1x1xf32, #tpu.memory_space<smem>>
    memref.store %40, %arg3[%c0_13, %c0_14] : memref<1x1xf32, #tpu.memory_space<smem>>
    return
  }
  func.func @transform_0(%arg0: i32) -> (i32, i32) {
    %c0_i32 = arith.constant 0 : i32
    %c0_i32_0 = arith.constant 0 : i32
    return %arg0, %c0_i32 : i32, i32
  }
  func.func @transform_1(%arg0: i32) -> (i32, i32) {
    %c0_i32 = arith.constant 0 : i32
    %c0_i32_0 = arith.constant 0 : i32
    return %arg0, %c0_i32 : i32, i32
  }
  func.func @transform_2(%arg0: i32) -> (i32, i32) {
    %c0_i32 = arith.constant 0 : i32
    %c0_i32_0 = arith.constant 0 : i32
    return %arg0, %c0_i32 : i32, i32
  }
}

</mosaic_0001>

<llo_original>
// kernel: tpu_custom_call.1
$region0: #{tpu_custom_call.1}
  #allocation0 [shape = 'u32[]', space=smem, size = 0x4, offset = 0x4, fixed_abs, tag = 'smem constant byte address 0x4 - core index']
  #allocation1 [shape = 'u32[144,128]{1,0:T(1,128)}', space=vmem, size = 0x12000, scoped, tag = 'internal scratch']
  %s0 = inlined_call_operand.vmem [shape: f32[8,32], index: 0, kind: input, shape index: {}]
  %s1 = inlined_call_operand.vmem [shape: s32[8,1], index: 1, kind: input, shape index: {}]
  %s2 = inlined_call_operand.hbm [shape: f32[1,1], index: 2, kind: output, shape index: {}]
  %s3 = sld [smem:[#allocation0]]
  $region18: #{tpu_custom_call.1} parent=0
    _
  %s5 = ssub.s32 1, %s3
  %s6 = scalar_select 0, %s5, %s3
  $region1: #{tpu_custom_call.1} parent=0
    #allocation2 [shape = 'u8[512]{0}', space=smem, size = 0x200, scoped, tag = 'output window, operand 0, single buffered']
    #allocation3 [shape = 's32[1]{0}', space=sflag, size = 0x4, scoped, tag = 'scoped memory for tpu_custom_call.1']
    %7 = vsyncpa [#allocation3], 0
    // Predicated region
    $region2: #{tpu_custom_call.1} parent=1 // pred_check
      _
    $region3: #{tpu_custom_call.1} parent=1 // pred_check_branch
      %9 = sbr.rel (0) target = $region5
    $region4: #{tpu_custom_call.1} parent=1 // pred_region
      _
    $region5: #{tpu_custom_call.1} parent=1 // pred_fallthru
      _
    // Predicated region
    $region6: #{tpu_custom_call.1} parent=1 // pred_check
      _
    $region7: #{tpu_custom_call.1} parent=1 // pred_check_branch
      %11 = sbr.rel (0) target = $region9
    $region8: #{tpu_custom_call.1} parent=1 // pred_region
      _
    $region9: #{tpu_custom_call.1} parent=1 // pred_fallthru
      _
    %v12 = vld [vmem:[%s0] sm:$0xff]
    %v13 = vld [vmem:[%s1] sm:$0xff]
    %vm14 = vcmask 261120
    %v15 = vsel %vm14, %v12, -inf
    %16 = vmax.xlane.f32.xlu0 %v15
    %v17 = vpop.xlane.xlu0 %16
    %v18 = vsub.f32 %v12, %v17
    %v19 = vmul.f32 %v18, 1.442695
    %v20 = vpow.pop %v19
    %v21 = vsel %vm14, %v20, 0.0
    %22 = vadd.xlane.f32.xlu0 %v21
    %v23 = vpop.xlane.xlu0 %22
    %v24 = vlaneseq
    %v25 = vand.u32 %v24, 127
    %26 = vset.pattern.permute.xlu0 0
    %27 = vperm.xlu0 %26, %v13
    %v28 = vpop.permute.xlu0 %27
    %vm29 = vcmp.eq.s32.totalorder %v25, %v28
    %v30 = vsel %vm29, %v18, 0.0
    %v31 = vsel %vm14, %v30, 0.0
    %32 = vadd.xlane.f32.xlu0 %v31
    %v33 = vpop.xlane.xlu0 %32
    %v34 = vsel %vm29, %v20, 0.0
    %v35 = vsel %vm14, %v34, 0.0
    %36 = vadd.xlane.f32.xlu0 %v35
    %v37 = vpop.xlane.xlu0 %36
    %v38 = vlog2.pop %v23
    %v39 = vmul.f32 %v38, 0.6931472
    %v40 = vsub.f32 %v39, %v33
    %v41 = vrcp.pop %v23
    %v42 = vmul.f32 %v37, %v41
    %v43 = vsub.f32 1.0, %v42
    %v44 = vmul.f32 %v43, %v43
    %v45 = vmul.f32 %v44, %v40
    %v46 = vlaneseq
    %v47 = vshrl.u32 %v46, 7
    %s48 = smul.u32 0, 8
    %v49 = vstv %s48
    %v50 = vadd.s32 %v47, %v49
    %vm51 = vcmp.lt.s32.totalorder %v50, 8
    %v52 = vsel %vm51, %v45, 0.0
    %vm53 = vcmask 7168
    %v54 = vsel %vm53, %v52, 0.0
    %55 = vadd.xlane.f32.xlu0 %v54
    %v56 = vpop.xlane.xlu0 %55
    %v57 = vrot.slane %v56, 4
    %v58 = vadd.f32 %v56, %v57
    %v59 = vrot.slane %v58, 2
    %v60 = vadd.f32 %v58, %v59
    %v61 = vrot.slane %v60, 1
    %v62 = vadd.f32 %v60, %v61
    %s63 = vtos %v62
    %s64 = scalar_lea.smem [#allocation2], 0
    %65 = sst [smem:[%s64]] %s63
    // Predicated region
    $region10: #{tpu_custom_call.1} parent=1 // pred_check
      _
    $region11: #{tpu_custom_call.1} parent=1 // pred_check_branch
      %67 = sbr.rel (0) target = $region13
    $region12: #{tpu_custom_call.1} parent=1 // pred_region
      %s69 = ssub.s32 16, 16
      %70 = vsyncadd [#allocation3], %s69
      %73 = dma.smem_to_hbm [#allocation2], 16, %s2, [#allocation3]
    $region13: #{tpu_custom_call.1} parent=1 // pred_fallthru
      _
    // Predicated region
    $region14: #{tpu_custom_call.1} parent=1 // pred_check
      _
    $region15: #{tpu_custom_call.1} parent=1 // pred_check_branch
      %75 = sbr.rel (0) target = $region17
    $region16: #{tpu_custom_call.1} parent=1 // pred_region
      %76 = dma.done [#allocation3], 16
    $region17: #{tpu_custom_call.1} parent=1 // pred_fallthru
      _
    %77 = sfence
    %78 = vsyncpa [#allocation3], 1

</llo_original>
